<compile_context>
chip_gen: v6e
topology: v6e:2x2x1
jax: 0.10.0
libtpu: 0.0.40
codegen_flags: <defaults>
</compile_context>

<pallas_src>
import jax
import jax.numpy as jnp
from jax.experimental import pallas as pl
from jax.experimental.pallas import tpu as pltpu

POWER_ITERATIONS = 1
EPS = 1e-12


# ----------------------------------------------------------------------------
# Kernel 1: power iteration -> sigma (and updated u, v).  All work on the VPU:
# broadcast multiplies + axis reductions, no transposes, no weight writeback.
# ----------------------------------------------------------------------------
def sigma_kernel(w_ref, u_ref, v_ref, sig_ref, u_out_ref, v_out_ref):
    w = w_ref[...]                    # (H, Wd) f32
    u = u_ref[...]                    # (H, 1)  column vector
    v = v_ref[...]                    # (1, Wd) row vector
    wv = jnp.zeros_like(u)
    for _ in range(POWER_ITERATIONS):
        vt = jnp.sum(w * u, axis=0, keepdims=True)        # W^T u -> (1, Wd)
        v = vt / (jnp.sqrt(jnp.sum(vt * vt)) + EPS)
        wv = jnp.sum(w * v, axis=1, keepdims=True)        # W v   -> (H, 1)
        u = wv / (jnp.sqrt(jnp.sum(wv * wv)) + EPS)
    sig_ref[...] = jnp.sum(u * wv, keepdims=True)          # (1, 1)
    u_out_ref[...] = u
    v_out_ref[...] = v


def compute_sigma(w2d, u_col, v_row):
    H, Wd = w2d.shape
    out_shapes = (
        jax.ShapeDtypeStruct((1, 1), jnp.float32),
        jax.ShapeDtypeStruct((H, 1), jnp.float32),
        jax.ShapeDtypeStruct((1, Wd), jnp.float32),
    )
    return pl.pallas_call(
        sigma_kernel,
        out_shape=out_shapes,
        grid=(1,),
        in_specs=[
            pl.BlockSpec((H, Wd), lambda i: (0, 0)),
            pl.BlockSpec((H, 1), lambda i: (0, 0)),
            pl.BlockSpec((1, Wd), lambda i: (0, 0)),
        ],
        out_specs=(
            pl.BlockSpec((1, 1), lambda i: (0, 0)),
            pl.BlockSpec((H, 1), lambda i: (0, 0)),
            pl.BlockSpec((1, Wd), lambda i: (0, 0)),
        ),
    )(w2d, u_col, v_row)


# ----------------------------------------------------------------------------
# Kernel 2: conv hot-path as a flipped matmul  (Cout, K) @ (K, M)  so the
# output lane axis is the big M tile.  bf16 operands, f32 accumulator scratch,
# K-reduction grid axis, and the 1/sigma + bias epilogue fused in.
# ----------------------------------------------------------------------------
def conv_matmul_kernel(w_ref, p_ref, sig_ref, bias_ref, o_ref, acc_ref):
    k = pl.program_id(1)

    @pl.when(k == 0)
    def _init():
        acc_ref[...] = jnp.zeros_like(acc_ref)

    acc_ref[...] += jnp.dot(w_ref[...], p_ref[...],
                            preferred_element_type=jnp.float32)

    @pl.when(k == pl.num_programs(1) - 1)
    def _finalize():
        inv_sigma = 1.0 / sig_ref[...]                        # (1, 1), exact
        o_ref[...] = (acc_ref[...] * inv_sigma
                      + bias_ref[...]).astype(o_ref.dtype)


def conv_matmul(w_bf, patches_t, sigma, bias_col, *, tm, tk):
    cout, K = w_bf.shape
    _, Mp = patches_t.shape
    assert Mp % tm == 0 and K % tk == 0
    grid = (Mp // tm, K // tk)                 # reduction (K) axis last
    return pl.pallas_call(
        conv_matmul_kernel,
        out_shape=jax.ShapeDtypeStruct((cout, Mp), jnp.float32),
        grid=grid,
        in_specs=[
            pl.BlockSpec((cout, tk), lambda i, k: (0, k)),    # weight (bf16)
            pl.BlockSpec((tk, tm), lambda i, k: (k, i)),      # patches (bf16)
            pl.BlockSpec((1, 1), lambda i, k: (0, 0)),        # sigma (f32)
            pl.BlockSpec((cout, 1), lambda i, k: (0, 0)),     # bias (f32)
        ],
        out_specs=pl.BlockSpec((cout, tm), lambda i, k: (0, i)),
        scratch_shapes=[pltpu.VMEM((cout, tm), jnp.float32)],
        compiler_params=pltpu.CompilerParams(
            dimension_semantics=("parallel", "arbitrary")),
    )(w_bf, patches_t, sigma, bias_col)


# ----------------------------------------------------------------------------
# Glue: im2col producing (K, M) directly (K ordered (c, kh, kw) to match
# w.view(height, -1); M ordered (n, h, w)), stride=1 "same" 3x3 conv.
# ----------------------------------------------------------------------------
def im2col_kxm(x, kh, kw, pad):
    n, c, h, w = x.shape
    xp = jnp.pad(x, ((0, 0), (0, 0), (pad, pad), (pad, pad)))
    taps = [xp[:, :, i:i + h, j:j + w] for i in range(kh) for j in range(kw)]
    p = jnp.stack(taps, axis=2)                   # (N, C, kh*kw, H, W)
    p = jnp.transpose(p, (1, 2, 0, 3, 4))         # (C, kh*kw, N, H, W)
    return p.reshape(c * kh * kw, n * h * w)      # (K, M)


def spectral_norm_conv_forward(x, w, bias, u, v):
    """Forward of SpectralNorm(nn.Conv2d(Cin, Cout, 3, padding=1)).

    Returns (y_nchw, u_new, v_new); the caller must carry u_new/v_new to
    reproduce torch's persistent power-iteration state across steps."""
    n, cin, h, wd = x.shape
    cout, _, kh, kw = w.shape
    K = cin * kh * kw
    w2d = w.reshape(cout, K)

    # --- kernel 1: sigma + updated (u, v); the weight itself never leaves HBM
    sigma, u_new, v_new = compute_sigma(
        w2d, u.reshape(cout, 1), v.reshape(1, K))

    # --- conv as (Cout,K)@(K,M) with the M axis lane-dense; bf16 operands ---
    # TODO(synk): fuse im2col into the matmul pipeline (tap grid axis indexing
    # a padded NHWC input) so this kh*kw-inflated slab is never materialized.
    patches_t = im2col_kxm(x.astype(jnp.bfloat16), kh, kw, pad=1)     # (K, M)
    M = n * h * wd

    tm = 256 if M <= 1024 else 512     # >=2 parallel grid steps at small M
    Mp = ((M + tm - 1) // tm) * tm     # pad M: no divisibility requirement
    if Mp != M:
        patches_t = jnp.pad(patches_t, ((0, 0), (0, Mp - M)))
    tk = K if (K <= 2048 or K % 512 != 0) else 512   # K-tiling for big convs

    y2d = conv_matmul(w2d.astype(jnp.bfloat16), patches_t, sigma,
                      bias.reshape(cout, 1).astype(jnp.float32),
                      tm=tm, tk=tk)                               # (Cout, Mp)
    y = y2d[:, :M].reshape(cout, n, h, wd)
    # NCHW to match the torch module; an NHWC pipeline would drop this transpose.
    return jnp.transpose(y, (1, 0, 2, 3)), u_new.reshape(-1), v_new.reshape(-1)


def l2normalize(v, eps=EPS):
    return v / (jnp.linalg.norm(v) + eps)


if __name__ == "__main__":
    key = jax.random.PRNGKey(0)
    k_x, k_w, k_b, k_u, k_v = jax.random.split(key, 5)

    # SpectralNorm(nn.Conv2d(4, 8, kernel_size=3, padding=1))
    N, CIN, H, W = 2, 4, 16, 16
    COUT, KH, KW = 8, 3, 3

    x = jax.random.normal(k_x, (N, CIN, H, W), dtype=jnp.float32)
    w_bar = jax.random.normal(k_w, (COUT, CIN, KH, KW), dtype=jnp.float32) * 0.1
    bias = jax.random.normal(k_b, (COUT,), dtype=jnp.float32) * 0.1
    u0 = l2normalize(jax.random.normal(k_u, (COUT,), dtype=jnp.float32))
    v0 = l2normalize(jax.random.normal(k_v, (CIN * KH * KW,), dtype=jnp.float32))

    y, u1, v1 = spectral_norm_conv_forward(x, w_bar, bias, u0, v0)
    y = jax.block_until_ready(y)

    # --- pure-JAX references ---
    w2d = w_bar.reshape(COUT, -1)
    v_ref = l2normalize(w2d.T @ u0)
    u_ref = l2normalize(w2d @ v_ref)
    sigma_ref = u_ref @ (w2d @ v_ref)

    # (a) precision-matched reference: same bf16 operands, f32 accumulation.
    y_acc = jax.lax.conv_general_dilated(
        x.astype(jnp.bfloat16), w_bar.astype(jnp.bfloat16),
        window_strides=(1, 1), padding=((1, 1), (1, 1)),
        dimension_numbers=("NCHW", "OIHW", "NCHW"),
        preferred_element_type=jnp.float32)
    y_ref_bf = y_acc / sigma_ref + bias.reshape(1, COUT, 1, 1)

    # (b) full-f32 reference: sanity bound on the bf16-input precision choice.
    y_ref_f32 = jax.lax.conv_general_dilated(
        x, w_bar / sigma_ref, window_strides=(1, 1), padding=((1, 1), (1, 1)),
        dimension_numbers=("NCHW", "OIHW", "NCHW"),
    ) + bias.reshape(1, COUT, 1, 1)

    assert y.shape == (N, COUT, H, W)
    assert jnp.allclose(u1, u_ref, rtol=1e-3, atol=1e-3)
    assert jnp.allclose(v1, v_ref, rtol=1e-3, atol=1e-3)
    assert jnp.allclose(y, y_ref_bf, rtol=1e-3, atol=1e-3)      # kernel correctness
    assert jnp.allclose(y, y_ref_f32, rtol=5e-2, atol=1e-1)     # bf16 precision sanity
    print("KERNEL_OK")
</pallas_src>

<mosaic_0001>
module attributes {stable_mosaic.version = 11 : i64} {
  func.func @sigma_kernel(%arg0: i32, %arg1: memref<8x36xf32, #tpu.memory_space<vmem>>, %arg2: memref<8x1xf32, #tpu.memory_space<vmem>>, %arg3: memref<1x36xf32, #tpu.memory_space<vmem>>, %arg4: memref<1x1xf32, #tpu.memory_space<vmem>>, %arg5: memref<8x1xf32, #tpu.memory_space<vmem>>, %arg6: memref<1x36xf32, #tpu.memory_space<vmem>>) attributes {dimension_semantics = [#tpu.dimension_semantics<arbitrary>], iteration_bounds = array<i64: 1>, scalar_prefetch = 0 : i64, scratch_operands = 0 : i64, tpu.core_type = #tpu.core_type<tc>, window_params = [{pipeline_mode = #tpu.pipeline_mode<synchronous>, transform_indices = @transform_0, window_bounds = array<i64: 8, 36>}, {pipeline_mode = #tpu.pipeline_mode<synchronous>, transform_indices = @transform_1, window_bounds = array<i64: 8, 1>}, {pipeline_mode = #tpu.pipeline_mode<synchronous>, transform_indices = @transform_2, window_bounds = array<i64: 1, 36>}, {pipeline_mode = #tpu.pipeline_mode<synchronous>, transform_indices = @transform_3, window_bounds = array<i64: 1, 1>}, {pipeline_mode = #tpu.pipeline_mode<synchronous>, transform_indices = @transform_4, window_bounds = array<i64: 8, 1>}, {pipeline_mode = #tpu.pipeline_mode<synchronous>, transform_indices = @transform_5, window_bounds = array<i64: 1, 36>}]} {
    %c0 = arith.constant 0 : index
    %c0_0 = arith.constant 0 : index
    %0 = vector.load %arg1[%c0, %c0_0] : memref<8x36xf32, #tpu.memory_space<vmem>>, vector<8x36xf32>
    %c0_1 = arith.constant 0 : index
    %c0_2 = arith.constant 0 : index
    %1 = vector.load %arg2[%c0_1, %c0_2] : memref<8x1xf32, #tpu.memory_space<vmem>>, vector<8x1xf32>
    %2 = vector.broadcast %1 : vector<8x1xf32> to vector<8x36xf32>
    %3 = arith.mulf %0, %2 : vector<8x36xf32>
    %cst = arith.constant dense<0.000000e+00> : vector<36xf32>
    %4 = vector.multi_reduction <add>, %3, %cst [0] : vector<8x36xf32> to vector<36xf32>
    %5 = vector.shape_cast %4 : vector<36xf32> to vector<1x36xf32>
    %6 = arith.mulf %5, %5 : vector<1x36xf32>
    %7 = vector.shape_cast %6 : vector<1x36xf32> to vector<1x1x36xf32>
    %cst_3 = arith.constant dense<0.000000e+00> : vector<1xf32>
    %8 = vector.multi_reduction <add>, %7, %cst_3 [1, 2] : vector<1x1x36xf32> to vector<1xf32>
    %9 = vector.shape_cast %8 : vector<1xf32> to vector<1x1x1xf32>
    %10 = vector.extract %9[0, 0, 0] : f32 from vector<1x1x1xf32>
    %11 = math.sqrt %10 : f32
    %cst_4 = arith.constant 9.99999996E-13 : f32
    %12 = arith.addf %11, %cst_4 : f32
    %13 = vector.broadcast %12 : f32 to vector<1x36xf32>
    %14 = arith.divf %5, %13 : vector<1x36xf32>
    %15 = vector.broadcast %14 : vector<1x36xf32> to vector<8x36xf32>
    %16 = arith.mulf %0, %15 : vector<8x36xf32>
    %cst_5 = arith.constant dense<0.000000e+00> : vector<8xf32>
    %17 = vector.multi_reduction <add>, %16, %cst_5 [1] : vector<8x36xf32> to vector<8xf32>
    %18 = vector.shape_cast %17 : vector<8xf32> to vector<8x1xf32>
    %19 = arith.mulf %18, %18 : vector<8x1xf32>
    %20 = vector.shape_cast %19 : vector<8x1xf32> to vector<1x8x1xf32>
    %cst_6 = arith.constant dense<0.000000e+00> : vector<1xf32>
    %21 = vector.multi_reduction <add>, %20, %cst_6 [1, 2] : vector<1x8x1xf32> to vector<1xf32>
    %22 = vector.shape_cast %21 : vector<1xf32> to vector<1x1x1xf32>
    %23 = vector.extract %22[0, 0, 0] : f32 from vector<1x1x1xf32>
    %24 = math.sqrt %23 : f32
    %cst_7 = arith.constant 9.99999996E-13 : f32
    %25 = arith.addf %24, %cst_7 : f32
    %26 = vector.broadcast %25 : f32 to vector<8x1xf32>
    %27 = arith.divf %18, %26 : vector<8x1xf32>
    %28 = arith.mulf %27, %18 : vector<8x1xf32>
    %29 = vector.shape_cast %28 : vector<8x1xf32> to vector<1x8x1xf32>
    %cst_8 = arith.constant dense<0.000000e+00> : vector<1xf32>
    %30 = vector.multi_reduction <add>, %29, %cst_8 [1, 2] : vector<1x8x1xf32> to vector<1xf32>
    %31 = vector.shape_cast %30 : vector<1xf32> to vector<1x1x1xf32>
    %32 = vector.extract %31[0, 0, 0] : f32 from vector<1x1x1xf32>
    %33 = vector.broadcast %32 : f32 to vector<1x1xf32>
    %c0_9 = arith.constant 0 : index
    %c0_10 = arith.constant 0 : index
    %34 = vector.load %arg4[%c0_9, %c0_10] : memref<1x1xf32, #tpu.memory_space<vmem>>, vector<1x1xf32>
    tpu.vector_store %arg4[%c0_9, %c0_10], %33 {strides = array<i32>} : memref<1x1xf32, #tpu.memory_space<vmem>>, vector<1x1xf32>,
    %c0_11 = arith.constant 0 : index
    %c0_12 = arith.constant 0 : index
    %35 = vector.load %arg5[%c0_11, %c0_12] : memref<8x1xf32, #tpu.memory_space<vmem>>, vector<8x1xf32>
    tpu.vector_store %arg5[%c0_11, %c0_12], %27 {strides = array<i32>} : memref<8x1xf32, #tpu.memory_space<vmem>>, vector<8x1xf32>,
    %c0_13 = arith.constant 0 : index
    %c0_14 = arith.constant 0 : index
    %36 = vector.load %arg6[%c0_13, %c0_14] : memref<1x36xf32, #tpu.memory_space<vmem>>, vector<1x36xf32>
    tpu.vector_store %arg6[%c0_13, %c0_14], %14 {strides = array<i32>} : memref<1x36xf32, #tpu.memory_space<vmem>>, vector<1x36xf32>,
    return
  }
  func.func @transform_0(%arg0: i32) -> (i32, i32) {
    %c0_i32 = arith.constant 0 : i32
    %c0_i32_0 = arith.constant 0 : i32
    %c0_i32_1 = arith.constant 0 : i32
    return %c0_i32, %c0_i32_0 : i32, i32
  }
  func.func @transform_1(%arg0: i32) -> (i32, i32) {
    %c0_i32 = arith.constant 0 : i32
    %c0_i32_0 = arith.constant 0 : i32
    %c0_i32_1 = arith.constant 0 : i32
    return %c0_i32, %c0_i32_0 : i32, i32
  }
  func.func @transform_2(%arg0: i32) -> (i32, i32) {
    %c0_i32 = arith.constant 0 : i32
    %c0_i32_0 = arith.constant 0 : i32
    %c0_i32_1 = arith.constant 0 : i32
    return %c0_i32, %c0_i32_0 : i32, i32
  }
  func.func @transform_3(%arg0: i32) -> (i32, i32) {
    %c0_i32 = arith.constant 0 : i32
    %c0_i32_0 = arith.constant 0 : i32
    %c0_i32_1 = arith.constant 0 : i32
    return %c0_i32, %c0_i32_0 : i32, i32
  }
  func.func @transform_4(%arg0: i32) -> (i32, i32) {
    %c0_i32 = arith.constant 0 : i32
    %c0_i32_0 = arith.constant 0 : i32
    %c0_i32_1 = arith.constant 0 : i32
    return %c0_i32, %c0_i32_0 : i32, i32
  }
  func.func @transform_5(%arg0: i32) -> (i32, i32) {
    %c0_i32 = arith.constant 0 : i32
    %c0_i32_0 = arith.constant 0 : i32
    %c0_i32_1 = arith.constant 0 : i32
    return %c0_i32, %c0_i32_0 : i32, i32
  }
}

</mosaic_0001>

<llo_original>
// kernel: tpu_custom_call.1
$region0: #{tpu_custom_call.1}
  #allocation0 [shape = 'u32[]', space=smem, size = 0x4, offset = 0x4, fixed_abs, tag = 'smem constant byte address 0x4 - core index']
  #allocation1 [shape = 'u32[144,128]{1,0:T(1,128)}', space=vmem, size = 0x12000, scoped, tag = 'internal scratch']
  %s0 = inlined_call_operand.vmem [shape: f32[8,36], index: 0, kind: input, shape index: {}]
  %s1 = inlined_call_operand.vmem [shape: f32[8,1], index: 1, kind: input, shape index: {}]
  %s2 = inlined_call_operand.vmem [shape: f32[1,36], index: 2, kind: input, shape index: {}]
  %s3 = inlined_call_operand.hbm [shape: f32[1,1], index: 3, kind: output, shape index: {0}]
  %s4 = inlined_call_operand.vmem [shape: f32[8,1], index: 4, kind: output, shape index: {1}]
  %s5 = inlined_call_operand.hbm [shape: f32[1,36], index: 5, kind: output, shape index: {2}]
  %6 = xla_tuple %s3, %s4, %s5
  %s7 = sld [smem:[#allocation0]]
  $region38: #{tpu_custom_call.1} parent=0
    _
  %s9 = ssub.s32 1, %s7
  %s10 = scalar_select 0, %s9, %s7
  $region1: #{tpu_custom_call.1} parent=0
    #allocation2 [shape = 'u8[512]{0}', space=vmem, size = 0x400, scoped, tag = 'output window, operand 0, single buffered']
    #allocation3 [shape = 's32[1]{0}', space=sflag, size = 0x4, scoped, tag = 'scoped memory for tpu_custom_call.1']
    #allocation4 [shape = 'u8[512]{0}', space=vmem, size = 0x400, scoped, tag = 'output window, operand 2, single buffered']
    #allocation5 [shape = 's32[1]{0}', space=sflag, size = 0x4, scoped, tag = 'scoped memory for tpu_custom_call.1']
    %11 = vsyncpa [#allocation3], 0
    %12 = vsyncpa [#allocation5], 0
    // Predicated region
    $region2: #{tpu_custom_call.1} parent=1 // pred_check
      _
    $region3: #{tpu_custom_call.1} parent=1 // pred_check_branch
      %14 = sbr.rel (0) target = $region5
    $region4: #{tpu_custom_call.1} parent=1 // pred_region
      _
    $region5: #{tpu_custom_call.1} parent=1 // pred_fallthru
      _
    // Predicated region
    $region6: #{tpu_custom_call.1} parent=1 // pred_check
      _
    $region7: #{tpu_custom_call.1} parent=1 // pred_check_branch
      %16 = sbr.rel (0) target = $region9
    $region8: #{tpu_custom_call.1} parent=1 // pred_region
      _
    $region9: #{tpu_custom_call.1} parent=1 // pred_fallthru
      _
    // Predicated region
    $region10: #{tpu_custom_call.1} parent=1 // pred_check
      _
    $region11: #{tpu_custom_call.1} parent=1 // pred_check_branch
      %18 = sbr.rel (0) target = $region13
    $region12: #{tpu_custom_call.1} parent=1 // pred_region
      _
    $region13: #{tpu_custom_call.1} parent=1 // pred_fallthru
      _
    %v19 = vld [vmem:[%s0] sm:$0xff]
    %v20 = vld [vmem:[%s1] sm:$0xff]
    %22 = vset.pattern.permute.xlu0 0
    %23 = vperm.xlu0 %22, %v20
    %v24 = vpop.permute.xlu0 %23
    %v26 = vmul.f32 %v19, %v24
    %vm27 = vcmask 293888
    %v28 = vsel %vm27, %v26, 0.0
    %v29 = vrot.slane %v28, 4
    %v30 = vadd.f32 %v28, %v29
    %v31 = vrot.slane %v30, 2
    %v32 = vadd.f32 %v30, %v31
    %v33 = vrot.slane %v32, 1
    %v34 = vadd.f32 %v32, %v33
    %v35 = vmul.f32 %v34, %v34
    %vm36 = vcmask 286720
    %v37 = vsel %vm36, %v35, 0.0
    %38 = vadd.xlane.f32.xlu0 %v37
    %v39 = vpop.xlane.xlu0 %38
    %v40 = vrot.slane %v39, 4
    %v41 = vadd.f32 %v39, %v40
    %v42 = vrot.slane %v41, 2
    %v43 = vadd.f32 %v41, %v42
    %v44 = vrot.slane %v43, 1
    %v45 = vadd.f32 %v43, %v44
    %s46 = vtos %v45
    %v47 = vstv %s46
    %v48 = vrsqrt.pop %v47
    %v49 = vmul.f32 %v47, %v48
    %vm50 = vcmp.eq.f32.partialorder %v47, inf
    %v51 = vsel %vm50, %v47, %v49
    %vm52 = vcmp.eq.f32.partialorder %v47, 0.0
    %v53 = vand.u32 %v47, 2147483648
    %v54 = vsel %vm52, %v53, %v51
    %s55 = vtos %v54
    %s56 = sadd.f32 %s55, 1e-12
    %v57 = vstv %s56
    %v58 = vrcp.pop %v57
    %v59 = vmul.f32 %v34, %v58
    %v60 = vmul.f32 %v19, %v59
    %v61 = vsel %vm27, %v60, 0.0
    %62 = vadd.xlane.f32.xlu0 %v61
    %v63 = vpop.xlane.xlu0 %62
    %v64 = vmul.f32 %v63, %v63
    %vm65 = vcmask 7168
    %v66 = vsel %vm65, %v64, 0.0
    %67 = vadd.xlane.f32.xlu0 %v66
    %v68 = vpop.xlane.xlu0 %67
    %v69 = vrot.slane %v68, 4
    %v70 = vadd.f32 %v68, %v69
    %v71 = vrot.slane %v70, 2
    %v72 = vadd.f32 %v70, %v71
    %v73 = vrot.slane %v72, 1
    %v74 = vadd.f32 %v72, %v73
    %s75 = vtos %v74
    %v76 = vstv %s75
    %v77 = vrsqrt.pop %v76
    %v78 = vmul.f32 %v76, %v77
    %vm79 = vcmp.eq.f32.partialorder %v76, inf
    %v80 = vsel %vm79, %v76, %v78
    %vm81 = vcmp.eq.f32.partialorder %v76, 0.0
    %v82 = vand.u32 %v76, 2147483648
    %v83 = vsel %vm81, %v82, %v80
    %s84 = vtos %v83
    %s85 = sadd.f32 %s84, 1e-12
    %v86 = vstv %s85
    %v87 = vrcp.pop %v86
    %v88 = vmul.f32 %v63, %v87
    %v89 = vmul.f32 %v88, %v63
    %v90 = vsel %vm65, %v89, 0.0
    %91 = vadd.xlane.f32.xlu0 %v90
    %v92 = vpop.xlane.xlu0 %91
    %v93 = vrot.slane %v92, 4
    %v94 = vadd.f32 %v92, %v93
    %v95 = vrot.slane %v94, 2
    %v96 = vadd.f32 %v94, %v95
    %v97 = vrot.slane %v96, 1
    %v98 = vadd.f32 %v96, %v97
    %s99 = vtos %v98
    %v100 = vstv %s99
    %vm101 = vcmask 0
    %102 = vst.msk [vmem:[#allocation2] sm:$0x1] %vm101, %v100
    %103 = vst.msk [vmem:[%s4] sm:$0xff] %vm65, %v88
    %104 = vst.msk [vmem:[#allocation4] sm:$0x1] %vm36, %v59
    // Predicated region
    $region14: #{tpu_custom_call.1} parent=1 // pred_check
      _
    $region15: #{tpu_custom_call.1} parent=1 // pred_check_branch
      %106 = sbr.rel (0) target = $region17
    $region16: #{tpu_custom_call.1} parent=1 // pred_region
      %s108 = ssub.s32 16, 16
      %109 = vsyncadd [#allocation3], %s108
      %s111 = sshll.u32 [#allocation2], 4
      %s112 = int_to_ptr.vmem [resolvable:$true] %s111
      %114 = dma.vmem_to_hbm [thread:$0]  %s112, 16, %s3, [#allocation3]
    $region17: #{tpu_custom_call.1} parent=1 // pred_fallthru
      _
    // Predicated region
    $region18: #{tpu_custom_call.1} parent=1 // pred_check
      _
    $region19: #{tpu_custom_call.1} parent=1 // pred_check_branch
      %116 = sbr.rel (0) target = $region21
    $region20: #{tpu_custom_call.1} parent=1 // pred_region
      _
    $region21: #{tpu_custom_call.1} parent=1 // pred_fallthru
      _
    // Predicated region
    $region22: #{tpu_custom_call.1} parent=1 // pred_check
      _
    $region23: #{tpu_custom_call.1} parent=1 // pred_check_branch
      %118 = sbr.rel (0) target = $region25
    $region24: #{tpu_custom_call.1} parent=1 // pred_region
      %s120 = ssub.s32 16, 16
      %121 = vsyncadd [#allocation5], %s120
      %s123 = sshll.u32 [#allocation4], 4
      %s124 = int_to_ptr.vmem [resolvable:$true] %s123
      %126 = dma.vmem_to_hbm [thread:$0]  %s124, 16, %s5, [#allocation5]
    $region25: #{tpu_custom_call.1} parent=1 // pred_fallthru
      _
    // Predicated region
    $region26: #{tpu_custom_call.1} parent=1 // pred_check
      _
    $region27: #{tpu_custom_call.1} parent=1 // pred_check_branch
      %128 = sbr.rel (0) target = $region29
    $region28: #{tpu_custom_call.1} parent=1 // pred_region
      %129 = dma.done [#allocation3], 16
    $region29: #{tpu_custom_call.1} parent=1 // pred_fallthru
      _
    // Predicated region
    $region30: #{tpu_custom_call.1} parent=1 // pred_check
      _
    $region31: #{tpu_custom_call.1} parent=1 // pred_check_branch
      %131 = sbr.rel (0) target = $region33
    $region32: #{tpu_custom_call.1} parent=1 // pred_region
      _
    $region33: #{tpu_custom_call.1} parent=1 // pred_fallthru
      _
    // Predicated region
    $region34: #{tpu_custom_call.1} parent=1 // pred_check
      _
    $region35: #{tpu_custom_call.1} parent=1 // pred_check_branch
      %133 = sbr.rel (0) target = $region37
    $region36: #{tpu_custom_call.1} parent=1 // pred_region
      %134 = dma.done [#allocation5], 16
    $region37: #{tpu_custom_call.1} parent=1 // pred_fallthru
      _
    %135 = vsyncpa [#allocation3], 1
    %136 = vsyncpa [#allocation5], 1

</llo_original>
